<compile_context>
chip_gen: v5e
topology: v5e:2x2
jax: 0.10.0
libtpu: 0.0.40
codegen_flags: <defaults>
</compile_context>

<pallas_src>
import jax
import jax.numpy as jnp
from jax.experimental import pallas as pl
from jax.experimental.pallas import tpu as pltpu


_ACTIVATIONS = {
    "ReLU": lambda h: jnp.maximum(h, 0.0),
    "Tanh": jnp.tanh,
    "Sigmoid": jax.nn.sigmoid,
    "LeakyReLU": lambda h: jnp.where(h >= 0.0, h, 0.05 * h),  # matches nn.LeakyReLU(0.05)
}

_VMEM_BUDGET = 40 << 20  # stay well under v7x's 64 MiB physical VMEM


def _round_up(n, m):
    return ((n + m - 1) // m) * m


def _make_decoder_kernel(n_layers, activation, carry_dtype):
    act = _ACTIVATIONS[activation]

    def kernel(*refs):
        # refs: zx, w0, b0, (w_i, b_i)*, wf, bf, out   (all feature-major)
        zx_ref, w0_ref, b0_ref = refs[:3]
        o_ref = refs[-1]

        # Layer 0: concat(z, x) was materialized feature-major in the wrapper,
        # so this is ONE MXU matmul with K = Fz + Fx (f32 accumulation).
        h = jnp.dot(w0_ref[...], zx_ref[...], preferred_element_type=jnp.float32)
        # bias + activation in f32 (v5e-safe), then carry the hidden state in
        # the MXU dtype (bf16) to halve intermediate VMEM/vreg footprint.
        h = act(h + b0_ref[...]).astype(carry_dtype)

        idx = 3
        for _ in range(n_layers - 1):
            w_ref, b_ref = refs[idx], refs[idx + 1]
            idx += 2
            h = jnp.dot(w_ref[...], h, preferred_element_type=jnp.float32)
            h = act(h + b_ref[...]).astype(carry_dtype)

        # Final linear (no activation); lane-dense store, cast once to out dtype.
        wf_ref, bf_ref = refs[idx], refs[idx + 1]
        out = jnp.dot(wf_ref[...], h, preferred_element_type=jnp.float32) + bf_ref[...]
        o_ref[...] = out.astype(o_ref.dtype)

    return kernel


def decoder_forward(z, x, params, *, activation="ReLU", tile_b=4096,
                    mxu_dtype=jnp.bfloat16, out_dtype=jnp.float32,
                    inputs_feature_major=False, output_feature_major=False):
    """Fused Decoder forward.

    Default layout: z [B, Fz], x [B, Fx] (f32), returns [B, F_out].
    With inputs_feature_major=True: z [Fz, B], x [Fx, B] (any float dtype);
    with output_feature_major=True the result is the [F_out, B] slab (no
    trailing transpose), letting the consumer fold the layout change.

    params: {"w": [(out,in) f32, ...], "b": [(out,1) f32, ...],
             "wf": (F_out,F_out) f32, "bf": (F_out,1) f32}
    """
    if inputs_feature_major:
        Fz, B = z.shape
        Fx, Bx = x.shape
    else:
        B, Fz = z.shape
        Bx, Fx = x.shape
    assert B == Bx

    ws, bs = params["w"], params["b"]
    wf, bf = params["wf"], params["bf"]
    n_layers = len(ws)
    F_in = Fz + Fx
    F_out = wf.shape[0]
    assert ws[0].shape[1] == F_in

    w_itm = jnp.dtype(mxu_dtype).itemsize
    o_itm = jnp.dtype(out_dtype).itemsize
    weight_bytes = sum(w.size * w_itm + b.size * 4
                       for w, b in zip(ws + [wf], bs + [bf]))
    max_h = max([w.shape[0] for w in ws] + [F_out])

    def _vmem_estimate(t):
        in_blk = F_in * t * w_itm
        out_blk = F_out * t * o_itm
        act_blk = max_h * t * (4 + w_itm)          # f32 acc + carry-dtype copy
        return weight_bytes + 2 * (in_blk + out_blk) + act_blk

    # Lane-dense batch tiling: multiple of 128 lanes, big enough to amortize
    # per-step overhead, but capped so the grid has >= 2 steps (v7x megacore).
    tile = min(tile_b, _round_up(pl.cdiv(B, 2), 128))
    tile = max(128, _round_up(tile, 128))
    while tile > 128 and _vmem_estimate(tile) > _VMEM_BUDGET:
        tile = max(128, _round_up(tile // 2, 128))
    if _vmem_estimate(tile) > _VMEM_BUDGET:
        # TODO(synk): stream weights per layer (K/N tiling) once the resident
        # weights alone exceed the v7x VMEM budget; not needed at these sizes.
        raise ValueError("Decoder weights too large for the resident-weight kernel")

    B_pad = _round_up(B, tile)
    grid = (B_pad // tile,)

    # Single fused concat -> feature-major [F_in, B_pad] MXU-dtype operand.
    if inputs_feature_major:
        zx_t = jnp.concatenate([z, x], axis=0)
    else:
        zx_t = jnp.concatenate([z, x], axis=-1).T
    zx_t = jnp.pad(zx_t.astype(mxu_dtype), ((0, 0), (0, B_pad - B)))

    operands = [zx_t, ws[0].astype(mxu_dtype), bs[0]]
    for w, b in zip(ws[1:], bs[1:]):
        operands += [w.astype(mxu_dtype), b]
    operands += [wf.astype(mxu_dtype), bf]

    act_spec = pl.BlockSpec((F_in, tile), lambda i: (0, i))
    # Constant (0,0) block index -> weights/biases stay VMEM-resident across
    # the batch grid (no per-step re-DMA).
    resident = lambda a: pl.BlockSpec(a.shape, lambda i: (0, 0))
    in_specs = [act_spec] + [resident(a) for a in operands[1:]]

    vmem_limit = int(min(max(32 << 20, int(1.5 * _vmem_estimate(tile))), 64 << 20))

    out_t = pl.pallas_call(
        _make_decoder_kernel(n_layers, activation, mxu_dtype),
        out_shape=jax.ShapeDtypeStruct((F_out, B_pad), out_dtype),
        grid_spec=pltpu.PrefetchScalarGridSpec(
            num_scalar_prefetch=0,
            grid=grid,
            in_specs=in_specs,
            out_specs=pl.BlockSpec((F_out, tile), lambda i: (0, i)),
        ),
        compiler_params=pltpu.CompilerParams(
            dimension_semantics=("parallel",),   # batch axis shards across TCs (v7x)
            vmem_limit_bytes=vmem_limit,
        ),
    )(*operands)

    out_t = out_t[:, :B]                 # drop padded batch columns (garbage)
    return out_t if output_feature_major else out_t.T


def init_params(key, z_size, x_size, layer_sizes):
    """PyTorch-Linear-style init; weights in native (out, in) layout.

    Matches the reference module: the final linear is Linear(last, last)."""
    input_size = z_size + x_size
    sizes_in = [input_size] + layer_sizes[:-1]
    n = len(layer_sizes)
    keys = jax.random.split(key, 2 * n + 2)
    ws, bs = [], []
    for li, (fi, fo) in enumerate(zip(sizes_in, layer_sizes)):
        bound = float(fi) ** -0.5
        ws.append(jax.random.uniform(keys[2 * li], (fo, fi), jnp.float32, -bound, bound))
        bs.append(jax.random.uniform(keys[2 * li + 1], (fo, 1), jnp.float32, -bound, bound))
    fl = layer_sizes[-1]
    bound = float(fl) ** -0.5
    wf = jax.random.uniform(keys[2 * n], (fl, fl), jnp.float32, -bound, bound)
    bf = jax.random.uniform(keys[2 * n + 1], (fl, 1), jnp.float32, -bound, bound)
    return {"w": ws, "b": bs, "wf": wf, "bf": bf}


def decoder_ref(z, x, params, activation="ReLU", mxu_dtype=jnp.bfloat16):
    """Pure-JAX reference matching kernel numerics (mxu_dtype operands, f32 acc)."""
    act = _ACTIVATIONS[activation]
    h = jnp.concatenate([z, x], axis=-1)
    for w, b in zip(params["w"], params["b"]):
        h = jnp.dot(h.astype(mxu_dtype), w.T.astype(mxu_dtype),
                    preferred_element_type=jnp.float32) + b[:, 0]
        h = act(h)
    out = jnp.dot(h.astype(mxu_dtype), params["wf"].T.astype(mxu_dtype),
                  preferred_element_type=jnp.float32) + params["bf"][:, 0]
    return out


if __name__ == "__main__":
    key = jax.random.PRNGKey(0)
    kz, kx, kp = jax.random.split(key, 3)

    z_size, x_size = 16, 16          # concat -> input_size = 32
    layer_sizes = [64, 32]           # MLP: 32->64->32, final linear 32->32
    batch = 256

    z = jax.random.normal(kz, (batch, z_size), jnp.float32)
    x = jax.random.normal(kx, (batch, x_size), jnp.float32)
    params = init_params(kp, z_size, x_size, layer_sizes)

    out = jax.block_until_ready(decoder_forward(z, x, params))
    ref = decoder_ref(z, x, params)
    assert out.shape == (batch, layer_sizes[-1])
    assert jnp.allclose(out, ref, atol=1e-3, rtol=1e-3)

    # Non-128-multiple batch exercises the padding path.
    z2, x2 = z[:200], x[:200]
    out2 = jax.block_until_ready(decoder_forward(z2, x2, params))
    ref2 = decoder_ref(z2, x2, params)
    assert out2.shape == (200, layer_sizes[-1])
    assert jnp.allclose(out2, ref2, atol=1e-3, rtol=1e-3)

    # Zero-copy call-site path: feature-major bf16 in/out (no wrapper transposes,
    # halved output writeback).
    z_fm = z.T.astype(jnp.bfloat16)
    x_fm = x.T.astype(jnp.bfloat16)
    out_fm = jax.block_until_ready(
        decoder_forward(z_fm, x_fm, params, inputs_feature_major=True,
                        output_feature_major=True, out_dtype=jnp.bfloat16))
    assert out_fm.shape == (layer_sizes[-1], batch)
    assert jnp.allclose(out_fm.T.astype(jnp.float32), ref, atol=5e-2, rtol=2e-2)

    print("KERNEL_OK")
</pallas_src>

<mosaic_0001>
module attributes {stable_mosaic.version = 11 : i64} {
  func.func @kernel(%arg0: i32, %arg1: memref<32x128xbf16, #tpu.memory_space<vmem>>, %arg2: memref<64x32xbf16, #tpu.memory_space<vmem>>, %arg3: memref<64x1xf32, #tpu.memory_space<vmem>>, %arg4: memref<32x64xbf16, #tpu.memory_space<vmem>>, %arg5: memref<32x1xf32, #tpu.memory_space<vmem>>, %arg6: memref<32x32xbf16, #tpu.memory_space<vmem>>, %arg7: memref<32x1xf32, #tpu.memory_space<vmem>>, %arg8: memref<32x128xf32, #tpu.memory_space<vmem>>) attributes {dimension_semantics = [#tpu.dimension_semantics<parallel>], iteration_bounds = array<i64: 2>, scalar_prefetch = 0 : i64, scratch_operands = 0 : i64, tpu.core_type = #tpu.core_type<tc>, window_params = [{transform_indices = @transform_0, window_bounds = array<i64: 32, 128>}, {pipeline_mode = #tpu.pipeline_mode<synchronous>, transform_indices = @transform_1, window_bounds = array<i64: 64, 32>}, {pipeline_mode = #tpu.pipeline_mode<synchronous>, transform_indices = @transform_2, window_bounds = array<i64: 64, 1>}, {pipeline_mode = #tpu.pipeline_mode<synchronous>, transform_indices = @transform_3, window_bounds = array<i64: 32, 64>}, {pipeline_mode = #tpu.pipeline_mode<synchronous>, transform_indices = @transform_4, window_bounds = array<i64: 32, 1>}, {pipeline_mode = #tpu.pipeline_mode<synchronous>, transform_indices = @transform_5, window_bounds = array<i64: 32, 32>}, {pipeline_mode = #tpu.pipeline_mode<synchronous>, transform_indices = @transform_6, window_bounds = array<i64: 32, 1>}, {transform_indices = @transform_7, window_bounds = array<i64: 32, 128>}]} {
    %c0 = arith.constant 0 : index
    %c0_0 = arith.constant 0 : index
    %0 = vector.load %arg2[%c0, %c0_0] : memref<64x32xbf16, #tpu.memory_space<vmem>>, vector<64x32xbf16>
    %c0_1 = arith.constant 0 : index
    %c0_2 = arith.constant 0 : index
    %1 = vector.load %arg1[%c0_1, %c0_2] : memref<32x128xbf16, #tpu.memory_space<vmem>>, vector<32x128xbf16>
    %cst = arith.constant dense<0.000000e+00> : vector<64x128xf32>
    %2 = tpu.matmul %0, %1, %cst {dimension_numbers = #tpu.dot_dimension_numbers<[1], [0], [0], [1], [0, 0, 1, 1], [], []>} : vector<64x32xbf16>, vector<32x128xbf16>, vector<64x128xf32> -> vector<64x128xf32>
    %c0_3 = arith.constant 0 : index
    %c0_4 = arith.constant 0 : index
    %3 = vector.load %arg3[%c0_3, %c0_4] : memref<64x1xf32, #tpu.memory_space<vmem>>, vector<64x1xf32>
    %4 = vector.broadcast %3 : vector<64x1xf32> to vector<64x128xf32>
    %5 = arith.addf %2, %4 : vector<64x128xf32>
    %cst_5 = arith.constant 0.000000e+00 : f32
    %6 = vector.broadcast %cst_5 : f32 to vector<64x128xf32>
    %7 = arith.maximumf %5, %6 : vector<64x128xf32>
    %8 = arith.truncf %7 : vector<64x128xf32> to vector<64x128xbf16>
    %c0_6 = arith.constant 0 : index
    %c0_7 = arith.constant 0 : index
    %9 = vector.load %arg4[%c0_6, %c0_7] : memref<32x64xbf16, #tpu.memory_space<vmem>>, vector<32x64xbf16>
    %cst_8 = arith.constant dense<0.000000e+00> : vector<32x128xf32>
    %10 = tpu.matmul %9, %8, %cst_8 {dimension_numbers = #tpu.dot_dimension_numbers<[1], [0], [0], [1], [0, 0, 1, 1], [], []>} : vector<32x64xbf16>, vector<64x128xbf16>, vector<32x128xf32> -> vector<32x128xf32>
    %c0_9 = arith.constant 0 : index
    %c0_10 = arith.constant 0 : index
    %11 = vector.load %arg5[%c0_9, %c0_10] : memref<32x1xf32, #tpu.memory_space<vmem>>, vector<32x1xf32>
    %12 = vector.broadcast %11 : vector<32x1xf32> to vector<32x128xf32>
    %13 = arith.addf %10, %12 : vector<32x128xf32>
    %cst_11 = arith.constant 0.000000e+00 : f32
    %14 = vector.broadcast %cst_11 : f32 to vector<32x128xf32>
    %15 = arith.maximumf %13, %14 : vector<32x128xf32>
    %16 = arith.truncf %15 : vector<32x128xf32> to vector<32x128xbf16>
    %c0_12 = arith.constant 0 : index
    %c0_13 = arith.constant 0 : index
    %17 = vector.load %arg6[%c0_12, %c0_13] : memref<32x32xbf16, #tpu.memory_space<vmem>>, vector<32x32xbf16>
    %cst_14 = arith.constant dense<0.000000e+00> : vector<32x128xf32>
    %18 = tpu.matmul %17, %16, %cst_14 {dimension_numbers = #tpu.dot_dimension_numbers<[1], [0], [0], [1], [0, 0, 1, 1], [], []>} : vector<32x32xbf16>, vector<32x128xbf16>, vector<32x128xf32> -> vector<32x128xf32>
    %c0_15 = arith.constant 0 : index
    %c0_16 = arith.constant 0 : index
    %19 = vector.load %arg7[%c0_15, %c0_16] : memref<32x1xf32, #tpu.memory_space<vmem>>, vector<32x1xf32>
    %20 = vector.broadcast %19 : vector<32x1xf32> to vector<32x128xf32>
    %21 = arith.addf %18, %20 : vector<32x128xf32>
    %c0_17 = arith.constant 0 : index
    %c0_18 = arith.constant 0 : index
    %22 = vector.load %arg8[%c0_17, %c0_18] : memref<32x128xf32, #tpu.memory_space<vmem>>, vector<32x128xf32>
    tpu.vector_store %arg8[%c0_17, %c0_18], %21 {strides = array<i32>} : memref<32x128xf32, #tpu.memory_space<vmem>>, vector<32x128xf32>,
    return
  }
  func.func @transform_0(%arg0: i32) -> (i32, i32) {
    %c0_i32 = arith.constant 0 : i32
    %c0_i32_0 = arith.constant 0 : i32
    return %c0_i32, %arg0 : i32, i32
  }
  func.func @transform_1(%arg0: i32) -> (i32, i32) {
    %c0_i32 = arith.constant 0 : i32
    %c0_i32_0 = arith.constant 0 : i32
    %c0_i32_1 = arith.constant 0 : i32
    return %c0_i32, %c0_i32_0 : i32, i32
  }
  func.func @transform_2(%arg0: i32) -> (i32, i32) {
    %c0_i32 = arith.constant 0 : i32
    %c0_i32_0 = arith.constant 0 : i32
    %c0_i32_1 = arith.constant 0 : i32
    return %c0_i32, %c0_i32_0 : i32, i32
  }
  func.func @transform_3(%arg0: i32) -> (i32, i32) {
    %c0_i32 = arith.constant 0 : i32
    %c0_i32_0 = arith.constant 0 : i32
    %c0_i32_1 = arith.constant 0 : i32
    return %c0_i32, %c0_i32_0 : i32, i32
  }
  func.func @transform_4(%arg0: i32) -> (i32, i32) {
    %c0_i32 = arith.constant 0 : i32
    %c0_i32_0 = arith.constant 0 : i32
    %c0_i32_1 = arith.constant 0 : i32
    return %c0_i32, %c0_i32_0 : i32, i32
  }
  func.func @transform_5(%arg0: i32) -> (i32, i32) {
    %c0_i32 = arith.constant 0 : i32
    %c0_i32_0 = arith.constant 0 : i32
    %c0_i32_1 = arith.constant 0 : i32
    return %c0_i32, %c0_i32_0 : i32, i32
  }
  func.func @transform_6(%arg0: i32) -> (i32, i32) {
    %c0_i32 = arith.constant 0 : i32
    %c0_i32_0 = arith.constant 0 : i32
    %c0_i32_1 = arith.constant 0 : i32
    return %c0_i32, %c0_i32_0 : i32, i32
  }
  func.func @transform_7(%arg0: i32) -> (i32, i32) {
    %c0_i32 = arith.constant 0 : i32
    %c0_i32_0 = arith.constant 0 : i32
    return %c0_i32, %arg0 : i32, i32
  }
}

</mosaic_0001>

<llo_original>
// kernel: tpu_custom_call.1
$region0: #{tpu_custom_call.1}
  #allocation0 [shape = 'u32[]', space=smem, size = 0x4, offset = 0x4, fixed_abs, tag = 'smem constant byte address 0x4 - core index']
  #allocation1 [shape = 'u32[72,128]{1,0:T(1,128)}', space=vmem, size = 0x9000, scoped, tag = 'internal scratch']
  %s0 = inlined_call_operand.vmem [shape: bf16[32,256], index: 0, kind: input, shape index: {}]
  %s1 = inlined_call_operand.vmem [shape: bf16[64,32], index: 1, kind: input, shape index: {}]
  %s2 = inlined_call_operand.vmem [shape: f32[64,1], index: 2, kind: input, shape index: {}]
  %s3 = inlined_call_operand.vmem [shape: bf16[32,64], index: 3, kind: input, shape index: {}]
  %s4 = inlined_call_operand.vmem [shape: f32[32,1], index: 4, kind: input, shape index: {}]
  %s5 = inlined_call_operand.vmem [shape: bf16[32,32], index: 5, kind: input, shape index: {}]
  %s6 = inlined_call_operand.vmem [shape: f32[32,1], index: 6, kind: input, shape index: {}]
  %s7 = inlined_call_operand.hbm [shape: f32[32,256], index: 7, kind: output, shape index: {}]
  %s8 = sld [smem:[#allocation0]]
  $region102: #{tpu_custom_call.1} parent=0
    _
  %s10 = ssub.s32 1, %s8
  %s11 = scalar_select 0, %s10, %s8
  $region1: #{tpu_custom_call.1} parent=0
    #allocation2 [shape = 'u8[16384]{0}', space=vmem, size = 0x4000, scoped, tag = 'input window, operand 0']
    #allocation3 [shape = 'u8[32768]{0}', space=vmem, size = 0x8000, scoped, tag = 'output window, operand 0']
    #allocation4 [shape = 's32[2]{0}', space=sflag, size = 0x8, scoped, tag = 'scoped memory for tpu_custom_call.1']
    %12 = vsyncpa [#allocation4], 0
    %s13 = scalar_lea.sflag [#allocation4], 1
    %14 = vsyncpa %s13, 0
    loop: start=0, step=1, limit=4
    $region2: #{tpu_custom_call.1} parent=1 // loop_pre_header
      _
    $region3: #{tpu_custom_call.1} parent=1 // loop_header
      %s16 = sphi 0, %s20
      %p17 = scmp.ge.s32.totalorder %s16, 4
      %s26 = sphi 0, %s28
      %s29 = sphi 0, %s26
      %s30 = sphi 0, %s29
      %s46 = sphi 0, %s30
      %s50 = sphi 0, %s50
      %s52 = sphi 0, %s50
      %s53 = sphi 0, %s52
      %s67 = sphi 0, %s53
      %s71 = sphi 0, %s71
      %s73 = sphi 0, %s71
      %s74 = sphi 0, %s73
      %s88 = sphi 0, %s74
      %s92 = sphi 0, %s92
      %s94 = sphi 0, %s92
      %s95 = sphi 0, %s94
      %s109 = sphi 0, %s95
      %s113 = sphi 0, %s113
      %s115 = sphi 0, %s113
      %s116 = sphi 0, %s115
      %s130 = sphi 0, %s116
      %s134 = sphi 0, %s134
      %s136 = sphi 0, %s134
      %s137 = sphi 0, %s136
      %s151 = sphi 0, %s137
      %s155 = sphi 0, %s155
      %s157 = sphi 0, %s155
      %s158 = sphi 0, %s157
      %s172 = sphi 0, %s158
      %s178 = sphi 0, %s180
      %s181 = sphi 0, %s178
      %s182 = sphi 0, %s181
      %s198 = sphi 0, %s182
    $region4: #{tpu_custom_call.1} parent=1 // loop_header_branch
      %19 = sbr.rel (%p17) target = $region8
    $region5: #{tpu_custom_call.1} parent=1 // loop_body
      %s21 = ssub.s32 %s16, 1
      %s22 = ssub.s32 %s16, 2
      %s23 = sadd.s32 %s16, 1
      %s24 = ssub.s32 %s16, %s23
      %p25 = scmp.eq.s32.totalorder %s24, 0
      %s27 = sadd.s32 %s26, 1
      %s28 = scalar_select %p25, %s26, %s27
      %p31 = pneg %p25
      %p32 = scmp.eq.s32.totalorder %s16, 1
      %p33 = por %p31, %p32
      %p34 = scmp.ne.s32.totalorder %s26, %s29
      %p35 = scmp.eq.s32.totalorder %s16, 0
      %p36 = por %p34, %p35
      %p37 = scmp.ne.s32.totalorder %s26, %s29
      %p38 = scmp.eq.s32.totalorder %s21, 1
      %p39 = por %p37, %p38
      %p40 = scmp.ne.s32.totalorder %s29, %s30
      %p41 = scmp.eq.s32.totalorder %s21, 0
      %p42 = por %p40, %p41
      %p43 = scmp.ne.s32.totalorder %s29, %s30
      %p44 = scmp.eq.s32.totalorder %s22, 1
      %p45 = por %p43, %p44
      %p47 = scmp.ne.s32.totalorder %s30, %s46
      %p48 = scmp.eq.s32.totalorder %s22, 0
      %p49 = por %p47, %p48
      %s51 = sadd.s32 %s50, 1
      %p54 = scmp.eq.s32.totalorder %s16, 1
      %p55 = scmp.ne.s32.totalorder %s50, %s52
      %p56 = scmp.eq.s32.totalorder %s16, 0
      %p57 = por %p55, %p56
      %p58 = scmp.ne.s32.totalorder %s50, %s52
      %p59 = scmp.eq.s32.totalorder %s21, 1
      %p60 = por %p58, %p59
      %p61 = scmp.ne.s32.totalorder %s52, %s53
      %p62 = scmp.eq.s32.totalorder %s21, 0
      %p63 = por %p61, %p62
      %p64 = scmp.ne.s32.totalorder %s52, %s53
      %p65 = scmp.eq.s32.totalorder %s22, 1
      %p66 = por %p64, %p65
      %p68 = scmp.ne.s32.totalorder %s53, %s67
      %p69 = scmp.eq.s32.totalorder %s22, 0
      %p70 = por %p68, %p69
      %s72 = sadd.s32 %s71, 1
      %p75 = scmp.eq.s32.totalorder %s16, 1
      %p76 = scmp.ne.s32.totalorder %s71, %s73
      %p77 = scmp.eq.s32.totalorder %s16, 0
      %p78 = por %p76, %p77
      %p79 = scmp.ne.s32.totalorder %s71, %s73
      %p80 = scmp.eq.s32.totalorder %s21, 1
      %p81 = por %p79, %p80
      %p82 = scmp.ne.s32.totalorder %s73, %s74
      %p83 = scmp.eq.s32.totalorder %s21, 0
      %p84 = por %p82, %p83
      %p85 = scmp.ne.s32.totalorder %s73, %s74
      %p86 = scmp.eq.s32.totalorder %s22, 1
      %p87 = por %p85, %p86
      %p89 = scmp.ne.s32.totalorder %s74, %s88
      %p90 = scmp.eq.s32.totalorder %s22, 0
      %p91 = por %p89, %p90
      %s93 = sadd.s32 %s92, 1
      %p96 = scmp.eq.s32.totalorder %s16, 1
      %p97 = scmp.ne.s32.totalorder %s92, %s94
      %p98 = scmp.eq.s32.totalorder %s16, 0
      %p99 = por %p97, %p98
      %p100 = scmp.ne.s32.totalorder %s92, %s94
      %p101 = scmp.eq.s32.totalorder %s21, 1
      %p102 = por %p100, %p101
      %p103 = scmp.ne.s32.totalorder %s94, %s95
      %p104 = scmp.eq.s32.totalorder %s21, 0
      %p105 = por %p103, %p104
      %p106 = scmp.ne.s32.totalorder %s94, %s95
      %p107 = scmp.eq.s32.totalorder %s22, 1
      %p108 = por %p106, %p107
      %p110 = scmp.ne.s32.totalorder %s95, %s109
      %p111 = scmp.eq.s32.totalorder %s22, 0
      %p112 = por %p110, %p111
      %s114 = sadd.s32 %s113, 1
      %p117 = scmp.eq.s32.totalorder %s16, 1
      %p118 = scmp.ne.s32.totalorder %s113, %s115
      %p119 = scmp.eq.s32.totalorder %s16, 0
      %p120 = por %p118, %p119
      %p121 = scmp.ne.s32.totalorder %s113, %s115
      %p122 = scmp.eq.s32.totalorder %s21, 1
      %p123 = por %p121, %p122
      %p124 = scmp.ne.s32.totalorder %s115, %s116
      %p125 = scmp.eq.s32.totalorder %s21, 0
      %p126 = por %p124, %p125
      %p127 = scmp.ne.s32.totalorder %s115, %s116
      %p128 = scmp.eq.s32.totalorder %s22, 1
      %p129 = por %p127, %p128
      %p131 = scmp.ne.s32.totalorder %s116, %s130
      %p132 = scmp.eq.s32.totalorder %s22, 0
      %p133 = por %p131, %p132
      %s135 = sadd.s32 %s134, 1
      %p138 = scmp.eq.s32.totalorder %s16, 1
      %p139 = scmp.ne.s32.totalorder %s134, %s136
      %p140 = scmp.eq.s32.totalorder %s16, 0
      %p141 = por %p139, %p140
      %p142 = scmp.ne.s32.totalorder %s134, %s136
      %p143 = scmp.eq.s32.totalorder %s21, 1
      %p144 = por %p142, %p143
      %p145 = scmp.ne.s32.totalorder %s136, %s137
      %p146 = scmp.eq.s32.totalorder %s21, 0
      %p147 = por %p145, %p146
      %p148 = scmp.ne.s32.totalorder %s136, %s137
      %p149 = scmp.eq.s32.totalorder %s22, 1
      %p150 = por %p148, %p149
      %p152 = scmp.ne.s32.totalorder %s137, %s151
      %p153 = scmp.eq.s32.totalorder %s22, 0
      %p154 = por %p152, %p153
      %s156 = sadd.s32 %s155, 1
      %p159 = scmp.eq.s32.totalorder %s16, 1
      %p160 = scmp.ne.s32.totalorder %s155, %s157
      %p161 = scmp.eq.s32.totalorder %s16, 0
      %p162 = por %p160, %p161
      %p163 = scmp.ne.s32.totalorder %s155, %s157
      %p164 = scmp.eq.s32.totalorder %s21, 1
      %p165 = por %p163, %p164
      %p166 = scmp.ne.s32.totalorder %s157, %s158
      %p167 = scmp.eq.s32.totalorder %s21, 0
      %p168 = por %p166, %p167
      %p169 = scmp.ne.s32.totalorder %s157, %s158
      %p170 = scmp.eq.s32.totalorder %s22, 1
      %p171 = por %p169, %p170
      %p173 = scmp.ne.s32.totalorder %s158, %s172
      %p174 = scmp.eq.s32.totalorder %s22, 0
      %p175 = por %p173, %p174
      %s176 = ssub.s32 %s16, %s23
      %p177 = scmp.eq.s32.totalorder %s176, 0
      %s179 = sadd.s32 %s178, 1
      %s180 = scalar_select %p177, %s178, %s179
      %p183 = pneg %p177
      %p184 = scmp.eq.s32.totalorder %s16, 1
      %p185 = por %p183, %p184
      %p186 = scmp.ne.s32.totalorder %s178, %s181
      %p187 = scmp.eq.s32.totalorder %s16, 0
      %p188 = por %p186, %p187
      %p189 = scmp.ne.s32.totalorder %s178, %s181
      %p190 = scmp.eq.s32.totalorder %s21, 1
      %p191 = por %p189, %p190
      %p192 = scmp.ne.s32.totalorder %s181, %s182
      %p193 = scmp.eq.s32.totalorder %s21, 0
      %p194 = por %p192, %p193
      %p195 = scmp.ne.s32.totalorder %s181, %s182
      %p196 = scmp.eq.s32.totalorder %s22, 1
      %p197 = por %p195, %p196
      %p199 = scmp.ne.s32.totalorder %s182, %s198
      %p200 = scmp.eq.s32.totalorder %s22, 0
      %p201 = por %p199, %p200
      %p202 = scmp.le.s32.totalorder 1, %s16
      %p203 = scmp.lt.s32.totalorder %s16, 3
      %p204 = pnand %p202, %p203
      %p205 = pneg %p204
      // Predicated region
      $region9: #{tpu_custom_call.1} parent=5 // pred_check
        _
      $region10: #{tpu_custom_call.1} parent=5 // pred_check_branch
        %207 = sbr.rel (%p204) target = $region12
      $region11: #{tpu_custom_call.1} parent=5 // pred_region
        %s208 = ssub.s32 %s16, 1
        // Predicated region
        $region13: #{tpu_custom_call.1} parent=11 // pred_check
          %p209 = pneg %p63
        $region14: #{tpu_custom_call.1} parent=11 // pred_check_branch
          %211 = sbr.rel (%p209) target = $region16
        $region15: #{tpu_custom_call.1} parent=11 // pred_region
          _
        $region16: #{tpu_custom_call.1} parent=11 // pred_fallthru
          _
        // Predicated region
        $region17: #{tpu_custom_call.1} parent=11 // pred_check
          %p212 = pneg %p84
        $region18: #{tpu_custom_call.1} parent=11 // pred_check_branch
          %214 = sbr.rel (%p212) target = $region20
        $region19: #{tpu_custom_call.1} parent=11 // pred_region
          _
        $region20: #{tpu_custom_call.1} parent=11 // pred_fallthru
          _
        // Predicated region
        $region21: #{tpu_custom_call.1} parent=11 // pred_check
          %p215 = pneg %p105
        $region22: #{tpu_custom_call.1} parent=11 // pred_check_branch
          %217 = sbr.rel (%p215) target = $region24
        $region23: #{tpu_custom_call.1} parent=11 // pred_region
          _
        $region24: #{tpu_custom_call.1} parent=11 // pred_fallthru
          _
        // Predicated region
        $region25: #{tpu_custom_call.1} parent=11 // pred_check
          %p218 = pneg %p126
        $region26: #{tpu_custom_call.1} parent=11 // pred_check_branch
          %220 = sbr.rel (%p218) target = $region28
        $region27: #{tpu_custom_call.1} parent=11 // pred_region
          _
        $region28: #{tpu_custom_call.1} parent=11 // pred_fallthru
          _
        // Predicated region
        $region29: #{tpu_custom_call.1} parent=11 // pred_check
          %p221 = pneg %p147
        $region30: #{tpu_custom_call.1} parent=11 // pred_check_branch
          %223 = sbr.rel (%p221) target = $region32
        $region31: #{tpu_custom_call.1} parent=11 // pred_region
          _
        $region32: #{tpu_custom_call.1} parent=11 // pred_fallthru
          _
        // Predicated region
        $region33: #{tpu_custom_call.1} parent=11 // pred_check
          %p224 = pneg %p168
        $region34: #{tpu_custom_call.1} parent=11 // pred_check_branch
          %226 = sbr.rel (%p224) target = $region36
        $region35: #{tpu_custom_call.1} parent=11 // pred_region
          _
        $region36: #{tpu_custom_call.1} parent=11 // pred_fallthru
          _
      $region12: #{tpu_custom_call.1} parent=5 // pred_fallthru
        _
      %p227 = scmp.lt.s32.totalorder %s16, 2
      // Predicated region
      $region37: #{tpu_custom_call.1} parent=5 // pred_check
        %p228 = pneg %p227
      $region38: #{tpu_custom_call.1} parent=5 // pred_check_branch
        %230 = sbr.rel (%p228) target = $region40
      $region39: #{tpu_custom_call.1} parent=5 // pred_region
        // Predicated region
        $region41: #{tpu_custom_call.1} parent=39 // pred_check
          %p231 = pneg %p36
        $region42: #{tpu_custom_call.1} parent=39 // pred_check_branch
          %233 = sbr.rel (%p231) target = $region44
        $region43: #{tpu_custom_call.1} parent=39 // pred_region
          %s234 = sand.u32 %s26, 1
          %s235 = sand.u32 %s26, 1
          %s236 = smul.addr %s235, 16
          %s237 = scalar_lea.vmem [#allocation2], %s236
          %s238 = smul.addr %s16, 4
          %s239 = scalar_lea.vmem %s0, %s238
          // Predicated region
          $region45: #{tpu_custom_call.1} parent=43 // pred_check
            _
          $region46: #{tpu_custom_call.1} parent=43 // pred_check_branch
            %241 = sbr.rel (0) target = $region48
          $region47: #{tpu_custom_call.1} parent=43 // pred_region
            // Predicated region
            $region49: #{tpu_custom_call.1} parent=47 // pred_check
              _
            $region50: #{tpu_custom_call.1} parent=47 // pred_check_branch
              %243 = sbr.rel target = $region52
            $region51: #{tpu_custom_call.1} parent=47 // pred_region
              // Predicated region
              $region64: #{tpu_custom_call.1} parent=51 // pred_check
                _
              $region65: #{tpu_custom_call.1} parent=51 // pred_check_branch
                %265 = sbr.rel (0) target = $region67
              $region66: #{tpu_custom_call.1} parent=51 // pred_region
                loop: start=0, step=1, limit=1
                $region68: #{tpu_custom_call.1} parent=66 // loop_pre_header
                  _
                $region69: #{tpu_custom_call.1} parent=66 // loop_header
                  %s267 = sphi 0, %s271
                  %p268 = scmp.ge.s32.totalorder %s267, 1
                  %s272 = sphi %s239, %s239
                  %s273 = sphi %s237, %s237
                $region70: #{tpu_custom_call.1} parent=66 // loop_header_branch
                  %270 = sbr.rel (%p268) target = $region74
                $region71: #{tpu_custom_call.1} parent=66 // loop_body
                  _
                $region72: #{tpu_custom_call.1} parent=66 // loop_footer
                  %s271 = sadd.s32 1, %s267
                $region73: #{tpu_custom_call.1} parent=66 // loop_footer_branch
                  %266 = sbr.rel target = $region69
                $region74: #{tpu_custom_call.1} parent=66 // loop_exit
                  _
                %s275 = ssub.s32 16, 1
                loop: start=0, step=1, limit=1
                $region75: #{tpu_custom_call.1} parent=66 // loop_pre_header
                  _
                $region76: #{tpu_custom_call.1} parent=66 // loop_header
                  %s277 = sphi 0, %s281
                  %p278 = scmp.ge.s32.totalorder %s277, 1
                  %s282 = sphi %s239, %s239
                  %s283 = sphi %s237, %s237
                $region77: #{tpu_custom_call.1} parent=66 // loop_header_branch
                  %280 = sbr.rel (%p278) target = $region81
                $region78: #{tpu_custom_call.1} parent=66 // loop_body
                  %v284 = vld [vmem:[%s282] sm:%s275]
                  %285 = vst [vmem:[%s283] sm:%s275] %v284
                  %v286 = vld [vmem:[%s282 + $0x8] sm:%s275]
                  %287 = vst [vmem:[%s283 + $0x4] sm:%s275] %v286
                  %v288 = vld [vmem:[%s282 + $0x10] sm:%s275]
                  %289 = vst [vmem:[%s283 + $0x8] sm:%s275] %v288
                  %v290 = vld [vmem:[%s282 + $0x18] sm:%s275]
                  %291 = vst [vmem:[%s283 + $0xc] sm:%s275] %v290
                $region79: #{tpu_custom_call.1} parent=66 // loop_footer
                  %s281 = sadd.s32 1, %s277
                $region80: #{tpu_custom_call.1} parent=66 // loop_footer_branch
                  %276 = sbr.rel target = $region76
                $region81: #{tpu_custom_call.1} parent=66 // loop_exit
                  _
              $region67: #{tpu_custom_call.1} parent=51 // pred_fallthru
                _
            $region52: #{tpu_custom_call.1} parent=47 // pred_fallthru
              _
            // Predicated region
            $region53: #{tpu_custom_call.1} parent=47 // pred_check
              _
            $region54: #{tpu_custom_call.1} parent=47 // pred_check_branch
              %245 = sbr.rel (0) target = $region56
            $region55: #{tpu_custom_call.1} parent=47 // pred_region
              %s247 = ssub.s32 16, 1
              loop: start=0, step=1, limit=1
              $region57: #{tpu_custom_call.1} parent=55 // loop_pre_header
                _
              $region58: #{tpu_custom_call.1} parent=55 // loop_header
                %s249 = sphi 0, %s253
                %p250 = scmp.ge.s32.totalorder %s249, 1
                %s254 = sphi %s239, %s239
                %s255 = sphi %s237, %s237
              $region59: #{tpu_custom_call.1} parent=55 // loop_header_branch
                %252 = sbr.rel (%p250) target = $region63
              $region60: #{tpu_custom_call.1} parent=55 // loop_body
                %v256 = vld [vmem:[%s254] sm:%s247]
                %257 = vst [vmem:[%s255] sm:%s247] %v256
                %v258 = vld [vmem:[%s254 + $0x8] sm:%s247]
                %259 = vst [vmem:[%s255 + $0x4] sm:%s247] %v258
                %v260 = vld [vmem:[%s254 + $0x10] sm:%s247]
                %261 = vst [vmem:[%s255 + $0x8] sm:%s247] %v260
                %v262 = vld [vmem:[%s254 + $0x18] sm:%s247]
                %263 = vst [vmem:[%s255 + $0xc] sm:%s247] %v262
              $region61: #{tpu_custom_call.1} parent=55 // loop_footer
                %s253 = sadd.s32 1, %s249
              $region62: #{tpu_custom_call.1} parent=55 // loop_footer_branch
                %248 = sbr.rel target = $region58
              $region63: #{tpu_custom_call.1} parent=55 // loop_exit
                _
            $region56: #{tpu_custom_call.1} parent=47 // pred_fallthru
              _
          $region48: #{tpu_custom_call.1} parent=43 // pred_fallthru
            _
          %292 = vnop
        $region44: #{tpu_custom_call.1} parent=39 // pred_fallthru
          _
      $region40: #{tpu_custom_call.1} parent=5 // pred_fallthru
        _
      %p293 = scmp.le.s32.totalorder 1, %s16
      %p294 = scmp.lt.s32.totalorder %s16, 3
      %p295 = pnand %p293, %p294
      %p296 = pneg %p295
      // Predicated region
      $region82: #{tpu_custom_call.1} parent=5 // pred_check
        _
      $region83: #{tpu_custom_call.1} parent=5 // pred_check_branch
        %298 = sbr.rel (%p295) target = $region85
      $region84: #{tpu_custom_call.1} parent=5 // pred_region
        %s299 = ssub.s32 %s16, 1
        %s300 = sand.u32 %s29, 1
        %s301 = sand.u32 %s29, 1
        %s302 = smul.addr %s301, 16
        %s303 = scalar_lea.vmem [#allocation2], %s302
        // Predicated region
        $region86: #{tpu_custom_call.1} parent=84 // pred_check
          %p304 = pneg %p42
        $region87: #{tpu_custom_call.1} parent=84 // pred_check_branch
          %306 = sbr.rel (%p304) target = $region89
        $region88: #{tpu_custom_call.1} parent=84 // pred_region
          _
        $region89: #{tpu_custom_call.1} parent=84 // pred_fallthru
          _
        %s307 = sand.u32 %s29, 1
        %s308 = sand.u32 %s29, 1
        %s309 = smul.addr %s308, 16
        %s310 = scalar_lea.vmem [#allocation2], %s309
        %p311 = pneg %p42
        %p312 = pneg %p39
        %p313 = pneg %p63
        %p314 = pneg %p60
        %p315 = pneg %p84
        %p316 = pneg %p81
        %p317 = pneg %p105
        %p318 = pneg %p102
        %p319 = pneg %p126
        %p320 = pneg %p123
        %p321 = pneg %p147
        %p322 = pneg %p144
        %p323 = pneg %p168
        %p324 = pneg %p165
        %p325 = pneg %p194
        %p326 = pneg %p191
        %s327 = sand.u32 %s181, 1
        %s328 = scalar_lea.sflag [#allocation4], %s327
        %s329 = sand.u32 %s181, 1
        %s330 = smul.addr %s329, 32
        %s331 = scalar_lea.vmem [#allocation3], %s330
        %v333 = vld [vmem:[%s1] sm:$0xf]
        %v334 = vld [vmem:[%s1 + $0x4] sm:$0xf]
        %v335 = vld [vmem:[%s1 + $0x8] sm:$0xf]
        %v336 = vld [vmem:[%s1 + $0xc] sm:$0xf]
        %v337 = vld [vmem:[%s1 + $0x10] sm:$0xf]
        %v338 = vld [vmem:[%s1 + $0x14] sm:$0xf]
        %v339 = vld [vmem:[%s1 + $0x18] sm:$0xf]
        %v340 = vld [vmem:[%s1 + $0x1c] sm:$0xf]
        %v341 = vld [vmem:[%s303] sm:$0xf]
        %v342 = vld [vmem:[%s303 + $0x4] sm:$0xf]
        %v343 = vld [vmem:[%s303 + $0x8] sm:$0xf]
        %v344 = vld [vmem:[%s303 + $0xc] sm:$0xf]
        %v345 = vld [vmem:[%s2] sm:$0xff]
        %v346 = vld [vmem:[%s2 + $0x8] sm:$0xff]
        %v347 = vld [vmem:[%s2 + $0x10] sm:$0xff]
        %v348 = vld [vmem:[%s2 + $0x18] sm:$0xff]
        %v349 = vld [vmem:[%s2 + $0x20] sm:$0xff]
        %v350 = vld [vmem:[%s2 + $0x28] sm:$0xff]
        %v351 = vld [vmem:[%s2 + $0x30] sm:$0xff]
        %v352 = vld [vmem:[%s2 + $0x38] sm:$0xff]
        %354 = vset.pattern.permute.xlu0 0
        %355 = vperm.xlu0 %354, %v345
        %v356 = vpop.permute.xlu0 %355
        %359 = vset.pattern.permute.xlu0 0
        %360 = vperm.xlu0 %359, %v346
        %v361 = vpop.permute.xlu0 %360
        %364 = vset.pattern.permute.xlu0 0
        %365 = vperm.xlu0 %364, %v347
        %v366 = vpop.permute.xlu0 %365
        %369 = vset.pattern.permute.xlu0 0
        %370 = vperm.xlu0 %369, %v348
        %v371 = vpop.permute.xlu0 %370
        %374 = vset.pattern.permute.xlu0 0
        %375 = vperm.xlu0 %374, %v349
        %v376 = vpop.permute.xlu0 %375
        %379 = vset.pattern.permute.xlu0 0
        %380 = vperm.xlu0 %379, %v350
        %v381 = vpop.permute.xlu0 %380
        %384 = vset.pattern.permute.xlu0 0
        %385 = vperm.xlu0 %384, %v351
        %v386 = vpop.permute.xlu0 %385
        %389 = vset.pattern.permute.xlu0 0
        %390 = vperm.xlu0 %389, %v352
        %v391 = vpop.permute.xlu0 %390
        %v401 = vunpack.c.l.b16 %v333
        %v402 = vunpack.c.l.b16 %v334
        %v403 = vunpack.c.l.b16 %v335
        %v404 = vunpack.c.l.b16 %v336
        %v405 = vunpack.c.l.b16 %v337
        %v406 = vunpack.c.l.b16 %v338
        %v407 = vunpack.c.l.b16 %v339
        %v408 = vunpack.c.l.b16 %v340
        %v409 = vpack.c.b16 %v402, %v401
        %v410 = vpack.c.b16 %v404, %v403
        %v411 = vpack.c.b16 %v406, %v405
        %v412 = vpack.c.b16 %v408, %v407
        %v417 = vunpack.c.l.b16 %v341
        %v418 = vunpack.c.l.b16 %v342
        %v419 = vunpack.c.l.b16 %v343
        %v420 = vunpack.c.l.b16 %v344
        %v421 = vpack.c.b16 %v418, %v417
        %v422 = vpack.c.b16 %v420, %v419
        %vm425 = vcmask 261120
        %v427 = vsel %vm425, %v409, 0
        %v430 = vsel %vm425, %v410, 0
        %v433 = vsel %vm425, %v411, 0
        %v436 = vsel %vm425, %v412, 0
        %438 = vmatpush.bf16.msra.mxu0 0
        %439 = vmatpush.bf16.msra.mxu0 0
        %440 = vmatpush.bf16.msra.mxu0 0
        %441 = vmatpush.bf16.msra.mxu0 0
        %442 = vmatpush.bf16.msra.mxu0 0
        %443 = vmatpush.bf16.msra.mxu0 0
        %444 = vmatpush.bf16.msra.mxu0 %v422
        %445 = vmatpush.bf16.msra.mxu0 %v421
        %446 = vmatmul.bf16.gmra.mxu0 %v427
        %v447 = vpop.f32.mrf.mxu0
        %v448 = vadd.f32 %v356, %v447
        %v449 = vpop.f32.mrf.mxu0
        %v450 = vadd.f32 %v361, %v449
        %451 = vmatmul.bf16.gmra.mxu0 %v430
        %v452 = vpop.f32.mrf.mxu0
        %v453 = vadd.f32 %v366, %v452
        %v454 = vpop.f32.mrf.mxu0
        %v455 = vadd.f32 %v371, %v454
        %456 = vmatmul.bf16.gmra.mxu0 %v433
        %v457 = vpop.f32.mrf.mxu0
        %v458 = vadd.f32 %v376, %v457
        %v459 = vpop.f32.mrf.mxu0
        %v460 = vadd.f32 %v381, %v459
        %461 = vmatmul.bf16.gmra.mxu0 %v436
        %v462 = vpop.f32.mrf.mxu0
        %v463 = vadd.f32 %v386, %v462
        %v464 = vpop.f32.mrf.mxu0
        %v465 = vadd.f32 %v391, %v464
        %466 = vdwg.mxu0
        %v467 = vmax.f32 %v448, 0.0
        %v468 = vmax.f32 %v450, 0.0
        %v469 = vmax.f32 %v453, 0.0
        %v470 = vmax.f32 %v455, 0.0
        %v471 = vmax.f32 %v458, 0.0
        %v472 = vmax.f32 %v460, 0.0
        %v473 = vmax.f32 %v463, 0.0
        %v474 = vmax.f32 %v465, 0.0
        %v475 = vpack.c.bf16 %v468, %v467
        %v476 = vpack.c.bf16 %v470, %v469
        %v477 = vpack.c.bf16 %v472, %v471
        %v478 = vpack.c.bf16 %v474, %v473
        %v479 = vld [vmem:[%s3] sm:$0xf]
        %v480 = vld [vmem:[%s3 + $0x4] sm:$0xf]
        %v481 = vld [vmem:[%s3 + $0x8] sm:$0xf]
        %v482 = vld [vmem:[%s3 + $0xc] sm:$0xf]
        %v483 = vld [vmem:[%s4] sm:$0xff]
        %v484 = vld [vmem:[%s4 + $0x8] sm:$0xff]
        %v485 = vld [vmem:[%s4 + $0x10] sm:$0xff]
        %v486 = vld [vmem:[%s4 + $0x18] sm:$0xff]
        %488 = vset.pattern.permute.xlu0 0
        %489 = vperm.xlu0 %488, %v483
        %v490 = vpop.permute.xlu0 %489
        %493 = vset.pattern.permute.xlu0 0
        %494 = vperm.xlu0 %493, %v484
        %v495 = vpop.permute.xlu0 %494
        %498 = vset.pattern.permute.xlu0 0
        %499 = vperm.xlu0 %498, %v485
        %v500 = vpop.permute.xlu0 %499
        %503 = vset.pattern.permute.xlu0 0
        %504 = vperm.xlu0 %503, %v486
        %v505 = vpop.permute.xlu0 %504
        %v511 = vunpack.c.l.b16 %v479
        %v512 = vunpack.c.l.b16 %v480
        %v513 = vunpack.c.l.b16 %v481
        %v514 = vunpack.c.l.b16 %v482
        %v515 = vpack.c.b16 %v512, %v511
        %v516 = vpack.c.b16 %v514, %v513
        %vm517 = vcmask 523264
        %v519 = vsel %vm517, %v515, 0
        %v522 = vsel %vm517, %v516, 0
        %524 = vmatpush.bf16.msra.mxu0 0
        %525 = vmatpush.bf16.msra.mxu0 0
        %526 = vmatpush.bf16.msra.mxu0 0
        %527 = vmatpush.bf16.msra.mxu0 0
        %528 = vmatpush.bf16.msra.mxu0 %v478
        %529 = vmatpush.bf16.msra.mxu0 %v477
        %530 = vmatpush.bf16.msra.mxu0 %v476
        %531 = vmatpush.bf16.msra.mxu0 %v475
        %532 = vmatmul.bf16.gmra.mxu0 %v519
        %v533 = vpop.f32.mrf.mxu0
        %v534 = vadd.f32 %v490, %v533
        %v535 = vpop.f32.mrf.mxu0
        %v536 = vadd.f32 %v495, %v535
        %537 = vmatmul.bf16.gmra.mxu0 %v522
        %v538 = vpop.f32.mrf.mxu0
        %v539 = vadd.f32 %v500, %v538
        %v540 = vpop.f32.mrf.mxu0
        %v541 = vadd.f32 %v505, %v540
        %542 = vdwg.mxu0
        %v543 = vmax.f32 %v534, 0.0
        %v544 = vmax.f32 %v536, 0.0
        %v545 = vmax.f32 %v539, 0.0
        %v546 = vmax.f32 %v541, 0.0
        %v547 = vpack.c.bf16 %v544, %v543
        %v548 = vpack.c.bf16 %v546, %v545
        %v549 = vld [vmem:[%s5] sm:$0xf]
        %v550 = vld [vmem:[%s5 + $0x4] sm:$0xf]
        %v551 = vld [vmem:[%s5 + $0x8] sm:$0xf]
        %v552 = vld [vmem:[%s5 + $0xc] sm:$0xf]
        %v553 = vld [vmem:[%s6] sm:$0xff]
        %v554 = vld [vmem:[%s6 + $0x8] sm:$0xff]
        %v555 = vld [vmem:[%s6 + $0x10] sm:$0xff]
        %v556 = vld [vmem:[%s6 + $0x18] sm:$0xff]
        %558 = vset.pattern.permute.xlu0 0
        %559 = vperm.xlu0 %558, %v553
        %v560 = vpop.permute.xlu0 %559
        %563 = vset.pattern.permute.xlu0 0
        %564 = vperm.xlu0 %563, %v554
        %v565 = vpop.permute.xlu0 %564
        %568 = vset.pattern.permute.xlu0 0
        %569 = vperm.xlu0 %568, %v555
        %v570 = vpop.permute.xlu0 %569
        %573 = vset.pattern.permute.xlu0 0
        %574 = vperm.xlu0 %573, %v556
        %v575 = vpop.permute.xlu0 %574
        %v581 = vunpack.c.l.b16 %v549
        %v582 = vunpack.c.l.b16 %v550
        %v583 = vunpack.c.l.b16 %v551
        %v584 = vunpack.c.l.b16 %v552
        %v585 = vpack.c.b16 %v582, %v581
        %v586 = vpack.c.b16 %v584, %v583
        %v588 = vsel %vm425, %v585, 0
        %v591 = vsel %vm425, %v586, 0
        %593 = vmatpush.bf16.msra.mxu0 0
        %594 = vmatpush.bf16.msra.mxu0 0
        %595 = vmatpush.bf16.msra.mxu0 0
        %596 = vmatpush.bf16.msra.mxu0 0
        %597 = vmatpush.bf16.msra.mxu0 0
        %598 = vmatpush.bf16.msra.mxu0 0
        %599 = vmatpush.bf16.msra.mxu0 %v548
        %600 = vmatpush.bf16.msra.mxu0 %v547
        %601 = vmatmul.bf16.gmra.mxu0 %v588
        %v602 = vpop.f32.mrf.mxu0
        %v603 = vadd.f32 %v560, %v602
        %v604 = vpop.f32.mrf.mxu0
        %v605 = vadd.f32 %v565, %v604
        %606 = vmatmul.bf16.gmra.mxu0 %v591
        %v607 = vpop.f32.mrf.mxu0
        %v608 = vadd.f32 %v570, %v607
        %v609 = vpop.f32.mrf.mxu0
        %v610 = vadd.f32 %v575, %v609
        %611 = vdwg.mxu0
        %612 = vst [vmem:[%s331] sm:$0xff] %v603
        %613 = vst [vmem:[%s331 + $0x8] sm:$0xff] %v605
        %614 = vst [vmem:[%s331 + $0x10] sm:$0xff] %v608
        %615 = vst [vmem:[%s331 + $0x18] sm:$0xff] %v610
        %s616 = sand.u32 %s181, 1
        %s617 = scalar_lea.sflag [#allocation4], %s616
        %s618 = sand.u32 %s181, 1
        %s619 = smul.addr %s618, 32
        %s620 = scalar_lea.vmem [#allocation3], %s619
        // Predicated region
        $region90: #{tpu_custom_call.1} parent=84 // pred_check
          %p621 = pneg %p191
        $region91: #{tpu_custom_call.1} parent=84 // pred_check_branch
          %623 = sbr.rel (%p621) target = $region93
        $region92: #{tpu_custom_call.1} parent=84 // pred_region
          %625 = vsyncadd %s617, 0
          %s626 = smul.addr %s21, 8
          %s627 = scalar_lea.hbm %s7, %s626
          %s628 = sshll.u32 %s620, 4
          %s629 = int_to_ptr.vmem [resolvable:$true] %s628
          %s630 = sshll.u32 %s627, 4
          %s631 = int_to_ptr.hbm [resolvable:$true] %s630
          %636 = dma.vmem_to_hbm [thread:$0]  %s629, 512, %s631, %s617, 128, 256, 8
        $region93: #{tpu_custom_call.1} parent=84 // pred_fallthru
          _
      $region85: #{tpu_custom_call.1} parent=5 // pred_fallthru
        _
      %p637 = scmp.le.s32.totalorder 2, %s16
      // Predicated region
      $region94: #{tpu_custom_call.1} parent=5 // pred_check
        %p638 = pneg %p637
      $region95: #{tpu_custom_call.1} parent=5 // pred_check_branch
        %640 = sbr.rel (%p638) target = $region97
      $region96: #{tpu_custom_call.1} parent=5 // pred_region
        %s641 = ssub.s32 %s16, 2
        // Predicated region
        $region98: #{tpu_custom_call.1} parent=96 // pred_check
          %p642 = pneg %p197
        $region99: #{tpu_custom_call.1} parent=96 // pred_check_branch
          %644 = sbr.rel (%p642) target = $region101
        $region100: #{tpu_custom_call.1} parent=96 // pred_region
          %s645 = sand.u32 %s182, 1
          %s646 = scalar_lea.sflag [#allocation4], %s645
          %s647 = sand.u32 %s182, 1
          %s648 = smul.addr %s647, 32
          %s649 = scalar_lea.vmem [#allocation3], %s648
          %651 = dma.done %s646, 512
        $region101: #{tpu_custom_call.1} parent=96 // pred_fallthru
          _
      $region97: #{tpu_custom_call.1} parent=5 // pred_fallthru
        _
    $region6: #{tpu_custom_call.1} parent=1 // loop_footer
      %s20 = sadd.s32 1, %s16
    $region7: #{tpu_custom_call.1} parent=1 // loop_footer_branch
      %15 = sbr.rel target = $region3
    $region8: #{tpu_custom_call.1} parent=1 // loop_exit
      _
    %652 = vsyncpa [#allocation4], 1
    %s653 = scalar_lea.sflag [#allocation4], 1
    %654 = vsyncpa %s653, 1

</llo_original>
